<compile_context>
chip_gen: v7x
topology: tpu7x:2x2x1
jax: 0.10.0
libtpu: 0.0.40
codegen_flags: <defaults>
</compile_context>

<pallas_src>
import jax
import jax.numpy as jnp
from jax.experimental import pallas as pl
from jax.experimental.pallas import tpu as pltpu

H1 = 128   # hidden width of layer 1 (fixed by the PyTorch module)
H2 = 64    # hidden width of layer 2


def _round_up(v, m):
    return (v + m - 1) // m * m


def _mlp_logsoftmax_kernel(x_ref, w1_ref, b1_ref, w2_ref, b2_ref,
                           w3_ref, b3_ref, o_ref):
    # Cast the f32 input tile to bf16 on the VPU (hidden under the input DMA) so
    # all three matmuls take the bf16 MXU path with f32 accumulation.
    x = x_ref[...].astype(jnp.bfloat16)

    # Layer 1: Linear(n_feature -> 128) + ReLU.
    h1 = jnp.dot(x, w1_ref[...], preferred_element_type=jnp.float32)
    h1 = jnp.maximum(h1 + b1_ref[...], 0.0)

    # Layer 2: Linear(128 -> 64) + ReLU.
    h2 = jnp.dot(h1.astype(jnp.bfloat16), w2_ref[...],
                 preferred_element_type=jnp.float32)
    h2 = jnp.maximum(h2 + b2_ref[...], 0.0)

    # Layer 3: Linear(64 -> n_output).  No class padding / masking needed.
    logits = jnp.dot(h2.astype(jnp.bfloat16), w3_ref[...],
                     preferred_element_type=jnp.float32)
    logits = logits + b3_ref[...]

    # LogSoftmax over dim=1 (class axis), numerically stable (max-shifted), f32.
    m = jnp.max(logits, axis=-1, keepdims=True)
    shifted = logits - m
    lse = jnp.log(jnp.sum(jnp.exp(shifted), axis=-1, keepdims=True))
    o_ref[...] = shifted - lse


def net_3_layer_relu_forward(x, params, *, block_b=4096):
    """x: (B, n_feature) float32.  params: dict of w1,b1,w2,b2,w3,b3 (f32).

    Weights are stored as (in_features, out_features) so the kernel computes
    x @ W + b (transposed relative to PyTorch's nn.Linear storage).
    """
    B, n_feature = x.shape
    n_output = params["w3"].shape[1]

    # --- batch-tile selection -------------------------------------------------
    # (a) VMEM budget: double-buffered f32 x / out tiles plus in-kernel
    #     temporaries (bf16 x, h1/h2 in f32 + bf16) must fit with headroom
    #     (matters most on v7x's 64 MiB physical VMEM).
    bytes_per_row = (2 * n_feature * 4      # x tile, double-buffered, f32
                     + 2 * n_output * 4     # out tile, double-buffered, f32
                     + 2 * n_feature        # bf16 cast of x
                     + 6 * (H1 + H2)        # h1/h2 temporaries (f32 + bf16)
                     + 512)                 # slack
    vmem_budget = 20 * 1024 * 1024
    tb_vmem = max(8, (vmem_budget // bytes_per_row) // 8 * 8)
    # (b) guarantee >= 2 grid steps whenever B > 8 so the "parallel" batch axis
    #     can be sharded across both v7x TensorCores (no-op on v5e/v6e).
    tb_split = max(8, _round_up(pl.cdiv(B, 2), 8))
    TB = max(8, min(block_b, tb_vmem, tb_split))
    grid = (pl.cdiv(B, TB),)   # edge block covers the tail; no batch padding

    # Weights to bf16 once (tiny, VMEM-resident across all grid steps); biases f32.
    w1 = params["w1"].astype(jnp.bfloat16)
    w2 = params["w2"].astype(jnp.bfloat16)
    w3 = params["w3"].astype(jnp.bfloat16)
    b1 = params["b1"].astype(jnp.float32)
    b2 = params["b2"].astype(jnp.float32)
    b3 = params["b3"].astype(jnp.float32)

    flops = 2 * B * (n_feature * H1 + H1 * H2 + H2 * n_output)
    bytes_accessed = (B * n_feature * 4
                      + (w1.size + w2.size + w3.size) * 2
                      + (b1.size + b2.size + b3.size) * 4
                      + B * n_output * 4)
    cost = pl.CostEstimate(flops=flops,
                           transcendentals=B * (n_output + 1),
                           bytes_accessed=bytes_accessed)

    out = pl.pallas_call(
        _mlp_logsoftmax_kernel,
        out_shape=jax.ShapeDtypeStruct((B, n_output), jnp.float32),
        grid=grid,
        in_specs=[
            pl.BlockSpec((TB, n_feature), lambda i: (i, 0)),   # x: tiled over batch
            pl.BlockSpec((n_feature, H1), lambda i: (0, 0)),   # w1: VMEM-resident
            pl.BlockSpec((1, H1), lambda i: (0, 0)),           # b1
            pl.BlockSpec((H1, H2), lambda i: (0, 0)),          # w2
            pl.BlockSpec((1, H2), lambda i: (0, 0)),           # b2
            pl.BlockSpec((H2, n_output), lambda i: (0, 0)),    # w3
            pl.BlockSpec((1, n_output), lambda i: (0, 0)),     # b3
        ],
        out_specs=pl.BlockSpec((TB, n_output), lambda i: (i, 0)),
        compiler_params=pltpu.CompilerParams(
            dimension_semantics=("parallel",),       # megacore sharding on v7x
            vmem_limit_bytes=32 * 1024 * 1024,
        ),
        cost_estimate=cost,
    )(x.astype(jnp.float32), w1, b1, w2, b2, w3, b3)

    return out


def init_params(key, n_feature, n_output):
    """Deterministic init mimicking nn.Linear (uniform +/- 1/sqrt(fan_in)).

    Weights stored as (in_features, out_features); biases as (1, out) so they
    broadcast cleanly inside the kernel.
    """
    ks = jax.random.split(key, 6)

    def linear(kw, kb, fan_in, fan_out):
        bound = 1.0 / jnp.sqrt(jnp.float32(fan_in))
        w = jax.random.uniform(kw, (fan_in, fan_out), jnp.float32, -bound, bound)
        b = jax.random.uniform(kb, (1, fan_out), jnp.float32, -bound, bound)
        return w, b

    w1, b1 = linear(ks[0], ks[1], n_feature, H1)
    w2, b2 = linear(ks[2], ks[3], H1, H2)
    w3, b3 = linear(ks[4], ks[5], H2, n_output)
    return {"w1": w1, "b1": b1, "w2": w2, "b2": b2, "w3": w3, "b3": b3}


def _reference_forward(x, params):
    """Pure-JAX reference with the same bf16-matmul / f32-accumulate recipe."""
    bf = jnp.bfloat16
    h1 = jnp.maximum(jnp.dot(x.astype(bf), params["w1"].astype(bf),
                             preferred_element_type=jnp.float32) + params["b1"], 0.0)
    h2 = jnp.maximum(jnp.dot(h1.astype(bf), params["w2"].astype(bf),
                             preferred_element_type=jnp.float32) + params["b2"], 0.0)
    logits = jnp.dot(h2.astype(bf), params["w3"].astype(bf),
                     preferred_element_type=jnp.float32) + params["b3"]
    return jax.nn.log_softmax(logits, axis=1)


if __name__ == "__main__":
    key = jax.random.PRNGKey(0)
    k_x, k_p = jax.random.split(key)

    # Small shapes consistent with the module; B=10 with TB=8 exercises the
    # edge-block (partial tail tile) path and gives a 2-step grid.
    B, n_feature, n_output = 10, 32, 16
    x = jax.random.normal(k_x, (B, n_feature), dtype=jnp.float32)
    params = init_params(k_p, n_feature, n_output)

    out = net_3_layer_relu_forward(x, params)
    out = jax.block_until_ready(out)

    ref = _reference_forward(x, params)
    assert out.shape == (B, n_output)
    assert bool(jnp.all(jnp.isfinite(out)))
    assert jnp.allclose(out, ref, atol=5e-3, rtol=5e-3), (
        f"max abs err {float(jnp.max(jnp.abs(out - ref)))}")

    print("KERNEL_OK")
</pallas_src>

<mosaic_0001>
module attributes {stable_mosaic.version = 11 : i64} {
  func.func @_mlp_logsoftmax_kernel(%arg0: i32, %arg1: memref<8x32xf32, #tpu.memory_space<vmem>>, %arg2: memref<32x128xbf16, #tpu.memory_space<vmem>>, %arg3: memref<1x128xf32, #tpu.memory_space<vmem>>, %arg4: memref<128x64xbf16, #tpu.memory_space<vmem>>, %arg5: memref<1x64xf32, #tpu.memory_space<vmem>>, %arg6: memref<64x16xbf16, #tpu.memory_space<vmem>>, %arg7: memref<1x16xf32, #tpu.memory_space<vmem>>, %arg8: memref<8x16xf32, #tpu.memory_space<vmem>>) attributes {dimension_semantics = [#tpu.dimension_semantics<parallel>], iteration_bounds = array<i64: 2>, scalar_prefetch = 0 : i64, scratch_operands = 0 : i64, tpu.core_type = #tpu.core_type<tc>, window_params = [{transform_indices = @transform_0, window_bounds = array<i64: 8, 32>}, {pipeline_mode = #tpu.pipeline_mode<synchronous>, transform_indices = @transform_1, window_bounds = array<i64: 32, 128>}, {pipeline_mode = #tpu.pipeline_mode<synchronous>, transform_indices = @transform_2, window_bounds = array<i64: 1, 128>}, {pipeline_mode = #tpu.pipeline_mode<synchronous>, transform_indices = @transform_3, window_bounds = array<i64: 128, 64>}, {pipeline_mode = #tpu.pipeline_mode<synchronous>, transform_indices = @transform_4, window_bounds = array<i64: 1, 64>}, {pipeline_mode = #tpu.pipeline_mode<synchronous>, transform_indices = @transform_5, window_bounds = array<i64: 64, 16>}, {pipeline_mode = #tpu.pipeline_mode<synchronous>, transform_indices = @transform_6, window_bounds = array<i64: 1, 16>}, {transform_indices = @transform_7, window_bounds = array<i64: 8, 16>}]} {
    %c0 = arith.constant 0 : index
    %c0_0 = arith.constant 0 : index
    %0 = vector.load %arg1[%c0, %c0_0] : memref<8x32xf32, #tpu.memory_space<vmem>>, vector<8x32xf32>
    %1 = arith.truncf %0 : vector<8x32xf32> to vector<8x32xbf16>
    %c0_1 = arith.constant 0 : index
    %c0_2 = arith.constant 0 : index
    %2 = vector.load %arg2[%c0_1, %c0_2] : memref<32x128xbf16, #tpu.memory_space<vmem>>, vector<32x128xbf16>
    %cst = arith.constant dense<0.000000e+00> : vector<8x128xf32>
    %3 = tpu.matmul %1, %2, %cst {dimension_numbers = #tpu.dot_dimension_numbers<[1], [0], [0], [1], [0, 0, 1, 1], [], []>} : vector<8x32xbf16>, vector<32x128xbf16>, vector<8x128xf32> -> vector<8x128xf32>
    %c0_3 = arith.constant 0 : index
    %c0_4 = arith.constant 0 : index
    %4 = vector.load %arg3[%c0_3, %c0_4] : memref<1x128xf32, #tpu.memory_space<vmem>>, vector<1x128xf32>
    %5 = vector.broadcast %4 : vector<1x128xf32> to vector<8x128xf32>
    %6 = arith.addf %3, %5 : vector<8x128xf32>
    %cst_5 = arith.constant 0.000000e+00 : f32
    %7 = vector.broadcast %cst_5 : f32 to vector<8x128xf32>
    %8 = arith.maximumf %6, %7 : vector<8x128xf32>
    %9 = arith.truncf %8 : vector<8x128xf32> to vector<8x128xbf16>
    %c0_6 = arith.constant 0 : index
    %c0_7 = arith.constant 0 : index
    %10 = vector.load %arg4[%c0_6, %c0_7] : memref<128x64xbf16, #tpu.memory_space<vmem>>, vector<128x64xbf16>
    %cst_8 = arith.constant dense<0.000000e+00> : vector<8x64xf32>
    %11 = tpu.matmul %9, %10, %cst_8 {dimension_numbers = #tpu.dot_dimension_numbers<[1], [0], [0], [1], [0, 0, 1, 1], [], []>} : vector<8x128xbf16>, vector<128x64xbf16>, vector<8x64xf32> -> vector<8x64xf32>
    %c0_9 = arith.constant 0 : index
    %c0_10 = arith.constant 0 : index
    %12 = vector.load %arg5[%c0_9, %c0_10] : memref<1x64xf32, #tpu.memory_space<vmem>>, vector<1x64xf32>
    %13 = vector.broadcast %12 : vector<1x64xf32> to vector<8x64xf32>
    %14 = arith.addf %11, %13 : vector<8x64xf32>
    %cst_11 = arith.constant 0.000000e+00 : f32
    %15 = vector.broadcast %cst_11 : f32 to vector<8x64xf32>
    %16 = arith.maximumf %14, %15 : vector<8x64xf32>
    %17 = arith.truncf %16 : vector<8x64xf32> to vector<8x64xbf16>
    %c0_12 = arith.constant 0 : index
    %c0_13 = arith.constant 0 : index
    %18 = vector.load %arg6[%c0_12, %c0_13] : memref<64x16xbf16, #tpu.memory_space<vmem>>, vector<64x16xbf16>
    %cst_14 = arith.constant dense<0.000000e+00> : vector<8x16xf32>
    %19 = tpu.matmul %17, %18, %cst_14 {dimension_numbers = #tpu.dot_dimension_numbers<[1], [0], [0], [1], [0, 0, 1, 1], [], []>} : vector<8x64xbf16>, vector<64x16xbf16>, vector<8x16xf32> -> vector<8x16xf32>
    %c0_15 = arith.constant 0 : index
    %c0_16 = arith.constant 0 : index
    %20 = vector.load %arg7[%c0_15, %c0_16] : memref<1x16xf32, #tpu.memory_space<vmem>>, vector<1x16xf32>
    %21 = vector.broadcast %20 : vector<1x16xf32> to vector<8x16xf32>
    %22 = arith.addf %19, %21 : vector<8x16xf32>
    %cst_17 = arith.constant dense<0xFF800000> : vector<8xf32>
    %23 = vector.multi_reduction <maximumf>, %22, %cst_17 [1] : vector<8x16xf32> to vector<8xf32>
    %24 = vector.shape_cast %23 : vector<8xf32> to vector<8x1xf32>
    %25 = vector.broadcast %24 : vector<8x1xf32> to vector<8x16xf32>
    %26 = arith.subf %22, %25 : vector<8x16xf32>
    %27 = math.exp %26 : vector<8x16xf32>
    %cst_18 = arith.constant dense<0.000000e+00> : vector<8xf32>
    %28 = vector.multi_reduction <add>, %27, %cst_18 [1] : vector<8x16xf32> to vector<8xf32>
    %29 = vector.shape_cast %28 : vector<8xf32> to vector<8x1xf32>
    %30 = math.log %29 : vector<8x1xf32>
    %31 = vector.broadcast %30 : vector<8x1xf32> to vector<8x16xf32>
    %32 = arith.subf %26, %31 : vector<8x16xf32>
    %c0_19 = arith.constant 0 : index
    %c0_20 = arith.constant 0 : index
    %33 = vector.load %arg8[%c0_19, %c0_20] : memref<8x16xf32, #tpu.memory_space<vmem>>, vector<8x16xf32>
    tpu.vector_store %arg8[%c0_19, %c0_20], %32 {strides = array<i32>} : memref<8x16xf32, #tpu.memory_space<vmem>>, vector<8x16xf32>,
    return
  }
  func.func @transform_0(%arg0: i32) -> (i32, i32) {
    %c0_i32 = arith.constant 0 : i32
    %c0_i32_0 = arith.constant 0 : i32
    return %arg0, %c0_i32 : i32, i32
  }
  func.func @transform_1(%arg0: i32) -> (i32, i32) {
    %c0_i32 = arith.constant 0 : i32
    %c0_i32_0 = arith.constant 0 : i32
    %c0_i32_1 = arith.constant 0 : i32
    return %c0_i32, %c0_i32_0 : i32, i32
  }
  func.func @transform_2(%arg0: i32) -> (i32, i32) {
    %c0_i32 = arith.constant 0 : i32
    %c0_i32_0 = arith.constant 0 : i32
    %c0_i32_1 = arith.constant 0 : i32
    return %c0_i32, %c0_i32_0 : i32, i32
  }
  func.func @transform_3(%arg0: i32) -> (i32, i32) {
    %c0_i32 = arith.constant 0 : i32
    %c0_i32_0 = arith.constant 0 : i32
    %c0_i32_1 = arith.constant 0 : i32
    return %c0_i32, %c0_i32_0 : i32, i32
  }
  func.func @transform_4(%arg0: i32) -> (i32, i32) {
    %c0_i32 = arith.constant 0 : i32
    %c0_i32_0 = arith.constant 0 : i32
    %c0_i32_1 = arith.constant 0 : i32
    return %c0_i32, %c0_i32_0 : i32, i32
  }
  func.func @transform_5(%arg0: i32) -> (i32, i32) {
    %c0_i32 = arith.constant 0 : i32
    %c0_i32_0 = arith.constant 0 : i32
    %c0_i32_1 = arith.constant 0 : i32
    return %c0_i32, %c0_i32_0 : i32, i32
  }
  func.func @transform_6(%arg0: i32) -> (i32, i32) {
    %c0_i32 = arith.constant 0 : i32
    %c0_i32_0 = arith.constant 0 : i32
    %c0_i32_1 = arith.constant 0 : i32
    return %c0_i32, %c0_i32_0 : i32, i32
  }
  func.func @transform_7(%arg0: i32) -> (i32, i32) {
    %c0_i32 = arith.constant 0 : i32
    %c0_i32_0 = arith.constant 0 : i32
    return %arg0, %c0_i32 : i32, i32
  }
}

</mosaic_0001>

<llo_original>
// kernel: tpu_custom_call.1
$region0: #{tpu_custom_call.1}
  #allocation0 [shape = 'u32[]', space=smem, size = 0x4, offset = 0x4, fixed_abs, tag = 'smem constant byte address 0x4 - core index']
  #allocation1 [shape = 'u32[144,128]{1,0:T(1,128)}', space=vmem, size = 0x12000, scoped, tag = 'internal scratch']
  %s0 = inlined_call_operand.vmem [shape: f32[10,32], index: 0, kind: input, shape index: {}]
  %s1 = inlined_call_operand.vmem [shape: bf16[32,128], index: 1, kind: input, shape index: {}]
  %s2 = inlined_call_operand.vmem [shape: f32[1,128], index: 2, kind: input, shape index: {}]
  %s3 = inlined_call_operand.vmem [shape: bf16[128,64], index: 3, kind: input, shape index: {}]
  %s4 = inlined_call_operand.vmem [shape: f32[1,64], index: 4, kind: input, shape index: {}]
  %s5 = inlined_call_operand.vmem [shape: bf16[64,16], index: 5, kind: input, shape index: {}]
  %s6 = inlined_call_operand.vmem [shape: f32[1,16], index: 6, kind: input, shape index: {}]
  %s7 = inlined_call_operand.hbm [shape: f32[10,16], index: 7, kind: output, shape index: {}]
  %s8 = sld [smem:[#allocation0]]
  $region61: #{tpu_custom_call.1} parent=0
    _
  %s10 = ssub.s32 1, %s8
  %s11 = scalar_select 0, %s10, %s8
  $region1: #{tpu_custom_call.1} parent=0
    #allocation2 [shape = 'u8[8192]{0}', space=vmem, size = 0x2000, scoped, tag = 'output window, operand 0']
    #allocation3 [shape = 's32[2]{0}', space=sflag, size = 0x8, scoped, tag = 'scoped memory for tpu_custom_call.1']
    %12 = vsyncpa [#allocation3], 0
    %s13 = scalar_lea.sflag [#allocation3], 1
    %14 = vsyncpa %s13, 0
    loop: start=0, step=1, limit=4
    $region2: #{tpu_custom_call.1} parent=1 // loop_pre_header
      _
    $region3: #{tpu_custom_call.1} parent=1 // loop_header
      %s16 = sphi 0, %s20
      %p17 = scmp.ge.s32.totalorder %s16, 4
      %s26 = sphi 0, %s28
      %s29 = sphi 0, %s26
      %s30 = sphi 0, %s29
      %s46 = sphi 0, %s30
      %s50 = sphi 0, %s50
      %s52 = sphi 0, %s50
      %s53 = sphi 0, %s52
      %s67 = sphi 0, %s53
      %s71 = sphi 0, %s71
      %s73 = sphi 0, %s71
      %s74 = sphi 0, %s73
      %s88 = sphi 0, %s74
      %s92 = sphi 0, %s92
      %s94 = sphi 0, %s92
      %s95 = sphi 0, %s94
      %s109 = sphi 0, %s95
      %s113 = sphi 0, %s113
      %s115 = sphi 0, %s113
      %s116 = sphi 0, %s115
      %s130 = sphi 0, %s116
      %s134 = sphi 0, %s134
      %s136 = sphi 0, %s134
      %s137 = sphi 0, %s136
      %s151 = sphi 0, %s137
      %s155 = sphi 0, %s155
      %s157 = sphi 0, %s155
      %s158 = sphi 0, %s157
      %s172 = sphi 0, %s158
      %s178 = sphi 0, %s180
      %s181 = sphi 0, %s178
      %s182 = sphi 0, %s181
      %s198 = sphi 0, %s182
    $region4: #{tpu_custom_call.1} parent=1 // loop_header_branch
      %19 = sbr.rel (%p17) target = $region8
    $region5: #{tpu_custom_call.1} parent=1 // loop_body
      %s21 = ssub.s32 %s16, 1
      %s22 = ssub.s32 %s16, 2
      %s23 = sadd.s32 %s16, 1
      %s24 = ssub.s32 %s16, %s23
      %p25 = scmp.eq.s32.totalorder %s24, 0
      %s27 = sadd.s32 %s26, 1
      %s28 = scalar_select %p25, %s26, %s27
      %p31 = pneg %p25
      %p32 = scmp.eq.s32.totalorder %s16, 1
      %p33 = por %p31, %p32
      %p34 = scmp.ne.s32.totalorder %s26, %s29
      %p35 = scmp.eq.s32.totalorder %s16, 0
      %p36 = por %p34, %p35
      %p37 = scmp.ne.s32.totalorder %s26, %s29
      %p38 = scmp.eq.s32.totalorder %s21, 1
      %p39 = por %p37, %p38
      %p40 = scmp.ne.s32.totalorder %s29, %s30
      %p41 = scmp.eq.s32.totalorder %s21, 0
      %p42 = por %p40, %p41
      %p43 = scmp.ne.s32.totalorder %s29, %s30
      %p44 = scmp.eq.s32.totalorder %s22, 1
      %p45 = por %p43, %p44
      %p47 = scmp.ne.s32.totalorder %s30, %s46
      %p48 = scmp.eq.s32.totalorder %s22, 0
      %p49 = por %p47, %p48
      %s51 = sadd.s32 %s50, 1
      %p54 = scmp.eq.s32.totalorder %s16, 1
      %p55 = scmp.ne.s32.totalorder %s50, %s52
      %p56 = scmp.eq.s32.totalorder %s16, 0
      %p57 = por %p55, %p56
      %p58 = scmp.ne.s32.totalorder %s50, %s52
      %p59 = scmp.eq.s32.totalorder %s21, 1
      %p60 = por %p58, %p59
      %p61 = scmp.ne.s32.totalorder %s52, %s53
      %p62 = scmp.eq.s32.totalorder %s21, 0
      %p63 = por %p61, %p62
      %p64 = scmp.ne.s32.totalorder %s52, %s53
      %p65 = scmp.eq.s32.totalorder %s22, 1
      %p66 = por %p64, %p65
      %p68 = scmp.ne.s32.totalorder %s53, %s67
      %p69 = scmp.eq.s32.totalorder %s22, 0
      %p70 = por %p68, %p69
      %s72 = sadd.s32 %s71, 1
      %p75 = scmp.eq.s32.totalorder %s16, 1
      %p76 = scmp.ne.s32.totalorder %s71, %s73
      %p77 = scmp.eq.s32.totalorder %s16, 0
      %p78 = por %p76, %p77
      %p79 = scmp.ne.s32.totalorder %s71, %s73
      %p80 = scmp.eq.s32.totalorder %s21, 1
      %p81 = por %p79, %p80
      %p82 = scmp.ne.s32.totalorder %s73, %s74
      %p83 = scmp.eq.s32.totalorder %s21, 0
      %p84 = por %p82, %p83
      %p85 = scmp.ne.s32.totalorder %s73, %s74
      %p86 = scmp.eq.s32.totalorder %s22, 1
      %p87 = por %p85, %p86
      %p89 = scmp.ne.s32.totalorder %s74, %s88
      %p90 = scmp.eq.s32.totalorder %s22, 0
      %p91 = por %p89, %p90
      %s93 = sadd.s32 %s92, 1
      %p96 = scmp.eq.s32.totalorder %s16, 1
      %p97 = scmp.ne.s32.totalorder %s92, %s94
      %p98 = scmp.eq.s32.totalorder %s16, 0
      %p99 = por %p97, %p98
      %p100 = scmp.ne.s32.totalorder %s92, %s94
      %p101 = scmp.eq.s32.totalorder %s21, 1
      %p102 = por %p100, %p101
      %p103 = scmp.ne.s32.totalorder %s94, %s95
      %p104 = scmp.eq.s32.totalorder %s21, 0
      %p105 = por %p103, %p104
      %p106 = scmp.ne.s32.totalorder %s94, %s95
      %p107 = scmp.eq.s32.totalorder %s22, 1
      %p108 = por %p106, %p107
      %p110 = scmp.ne.s32.totalorder %s95, %s109
      %p111 = scmp.eq.s32.totalorder %s22, 0
      %p112 = por %p110, %p111
      %s114 = sadd.s32 %s113, 1
      %p117 = scmp.eq.s32.totalorder %s16, 1
      %p118 = scmp.ne.s32.totalorder %s113, %s115
      %p119 = scmp.eq.s32.totalorder %s16, 0
      %p120 = por %p118, %p119
      %p121 = scmp.ne.s32.totalorder %s113, %s115
      %p122 = scmp.eq.s32.totalorder %s21, 1
      %p123 = por %p121, %p122
      %p124 = scmp.ne.s32.totalorder %s115, %s116
      %p125 = scmp.eq.s32.totalorder %s21, 0
      %p126 = por %p124, %p125
      %p127 = scmp.ne.s32.totalorder %s115, %s116
      %p128 = scmp.eq.s32.totalorder %s22, 1
      %p129 = por %p127, %p128
      %p131 = scmp.ne.s32.totalorder %s116, %s130
      %p132 = scmp.eq.s32.totalorder %s22, 0
      %p133 = por %p131, %p132
      %s135 = sadd.s32 %s134, 1
      %p138 = scmp.eq.s32.totalorder %s16, 1
      %p139 = scmp.ne.s32.totalorder %s134, %s136
      %p140 = scmp.eq.s32.totalorder %s16, 0
      %p141 = por %p139, %p140
      %p142 = scmp.ne.s32.totalorder %s134, %s136
      %p143 = scmp.eq.s32.totalorder %s21, 1
      %p144 = por %p142, %p143
      %p145 = scmp.ne.s32.totalorder %s136, %s137
      %p146 = scmp.eq.s32.totalorder %s21, 0
      %p147 = por %p145, %p146
      %p148 = scmp.ne.s32.totalorder %s136, %s137
      %p149 = scmp.eq.s32.totalorder %s22, 1
      %p150 = por %p148, %p149
      %p152 = scmp.ne.s32.totalorder %s137, %s151
      %p153 = scmp.eq.s32.totalorder %s22, 0
      %p154 = por %p152, %p153
      %s156 = sadd.s32 %s155, 1
      %p159 = scmp.eq.s32.totalorder %s16, 1
      %p160 = scmp.ne.s32.totalorder %s155, %s157
      %p161 = scmp.eq.s32.totalorder %s16, 0
      %p162 = por %p160, %p161
      %p163 = scmp.ne.s32.totalorder %s155, %s157
      %p164 = scmp.eq.s32.totalorder %s21, 1
      %p165 = por %p163, %p164
      %p166 = scmp.ne.s32.totalorder %s157, %s158
      %p167 = scmp.eq.s32.totalorder %s21, 0
      %p168 = por %p166, %p167
      %p169 = scmp.ne.s32.totalorder %s157, %s158
      %p170 = scmp.eq.s32.totalorder %s22, 1
      %p171 = por %p169, %p170
      %p173 = scmp.ne.s32.totalorder %s158, %s172
      %p174 = scmp.eq.s32.totalorder %s22, 0
      %p175 = por %p173, %p174
      %s176 = ssub.s32 %s16, %s23
      %p177 = scmp.eq.s32.totalorder %s176, 0
      %s179 = sadd.s32 %s178, 1
      %s180 = scalar_select %p177, %s178, %s179
      %p183 = pneg %p177
      %p184 = scmp.eq.s32.totalorder %s16, 1
      %p185 = por %p183, %p184
      %p186 = scmp.ne.s32.totalorder %s178, %s181
      %p187 = scmp.eq.s32.totalorder %s16, 0
      %p188 = por %p186, %p187
      %p189 = scmp.ne.s32.totalorder %s178, %s181
      %p190 = scmp.eq.s32.totalorder %s21, 1
      %p191 = por %p189, %p190
      %p192 = scmp.ne.s32.totalorder %s181, %s182
      %p193 = scmp.eq.s32.totalorder %s21, 0
      %p194 = por %p192, %p193
      %p195 = scmp.ne.s32.totalorder %s181, %s182
      %p196 = scmp.eq.s32.totalorder %s22, 1
      %p197 = por %p195, %p196
      %p199 = scmp.ne.s32.totalorder %s182, %s198
      %p200 = scmp.eq.s32.totalorder %s22, 0
      %p201 = por %p199, %p200
      %p202 = scmp.le.s32.totalorder 1, %s16
      %p203 = scmp.lt.s32.totalorder %s16, 3
      %p204 = pnand %p202, %p203
      %p205 = pneg %p204
      // Predicated region
      $region9: #{tpu_custom_call.1} parent=5 // pred_check
        _
      $region10: #{tpu_custom_call.1} parent=5 // pred_check_branch
        %207 = sbr.rel (%p204) target = $region12
      $region11: #{tpu_custom_call.1} parent=5 // pred_region
        %s208 = ssub.s32 %s16, 1
        // Predicated region
        $region13: #{tpu_custom_call.1} parent=11 // pred_check
          %p209 = pneg %p63
        $region14: #{tpu_custom_call.1} parent=11 // pred_check_branch
          %211 = sbr.rel (%p209) target = $region16
        $region15: #{tpu_custom_call.1} parent=11 // pred_region
          _
        $region16: #{tpu_custom_call.1} parent=11 // pred_fallthru
          _
        // Predicated region
        $region17: #{tpu_custom_call.1} parent=11 // pred_check
          %p212 = pneg %p84
        $region18: #{tpu_custom_call.1} parent=11 // pred_check_branch
          %214 = sbr.rel (%p212) target = $region20
        $region19: #{tpu_custom_call.1} parent=11 // pred_region
          _
        $region20: #{tpu_custom_call.1} parent=11 // pred_fallthru
          _
        // Predicated region
        $region21: #{tpu_custom_call.1} parent=11 // pred_check
          %p215 = pneg %p105
        $region22: #{tpu_custom_call.1} parent=11 // pred_check_branch
          %217 = sbr.rel (%p215) target = $region24
        $region23: #{tpu_custom_call.1} parent=11 // pred_region
          _
        $region24: #{tpu_custom_call.1} parent=11 // pred_fallthru
          _
        // Predicated region
        $region25: #{tpu_custom_call.1} parent=11 // pred_check
          %p218 = pneg %p126
        $region26: #{tpu_custom_call.1} parent=11 // pred_check_branch
          %220 = sbr.rel (%p218) target = $region28
        $region27: #{tpu_custom_call.1} parent=11 // pred_region
          _
        $region28: #{tpu_custom_call.1} parent=11 // pred_fallthru
          _
        // Predicated region
        $region29: #{tpu_custom_call.1} parent=11 // pred_check
          %p221 = pneg %p147
        $region30: #{tpu_custom_call.1} parent=11 // pred_check_branch
          %223 = sbr.rel (%p221) target = $region32
        $region31: #{tpu_custom_call.1} parent=11 // pred_region
          _
        $region32: #{tpu_custom_call.1} parent=11 // pred_fallthru
          _
        // Predicated region
        $region33: #{tpu_custom_call.1} parent=11 // pred_check
          %p224 = pneg %p168
        $region34: #{tpu_custom_call.1} parent=11 // pred_check_branch
          %226 = sbr.rel (%p224) target = $region36
        $region35: #{tpu_custom_call.1} parent=11 // pred_region
          _
        $region36: #{tpu_custom_call.1} parent=11 // pred_fallthru
          _
      $region12: #{tpu_custom_call.1} parent=5 // pred_fallthru
        _
      %p227 = scmp.lt.s32.totalorder %s16, 2
      // Predicated region
      $region37: #{tpu_custom_call.1} parent=5 // pred_check
        %p228 = pneg %p227
      $region38: #{tpu_custom_call.1} parent=5 // pred_check_branch
        %230 = sbr.rel (%p228) target = $region40
      $region39: #{tpu_custom_call.1} parent=5 // pred_region
        // Predicated region
        $region41: #{tpu_custom_call.1} parent=39 // pred_check
          %p231 = pneg %p36
        $region42: #{tpu_custom_call.1} parent=39 // pred_check_branch
          %233 = sbr.rel (%p231) target = $region44
        $region43: #{tpu_custom_call.1} parent=39 // pred_region
          %p234 = scmp.lt.s32.totalorder %s16, 1
          %s235 = scalar_select %p234, %s16, 1
          %s236 = smul.addr %s235, 8
          %s237 = scalar_lea.vmem %s0, %s236
        $region44: #{tpu_custom_call.1} parent=39 // pred_fallthru
          _
      $region40: #{tpu_custom_call.1} parent=5 // pred_fallthru
        _
      %p238 = scmp.le.s32.totalorder 1, %s16
      %p239 = scmp.lt.s32.totalorder %s16, 3
      %p240 = pnand %p238, %p239
      %p241 = pneg %p240
      // Predicated region
      $region45: #{tpu_custom_call.1} parent=5 // pred_check
        _
      $region46: #{tpu_custom_call.1} parent=5 // pred_check_branch
        %243 = sbr.rel (%p240) target = $region48
      $region47: #{tpu_custom_call.1} parent=5 // pred_region
        %s244 = ssub.s32 %s16, 1
        %p245 = scmp.lt.s32.totalorder %s21, 1
        %s246 = scalar_select %p245, %s21, 1
        %s247 = smul.addr %s246, 8
        %s248 = scalar_lea.vmem %s0, %s247
        %p249 = pneg %p42
        %p250 = pneg %p39
        %p251 = pneg %p63
        %p252 = pneg %p60
        %p253 = pneg %p84
        %p254 = pneg %p81
        %p255 = pneg %p105
        %p256 = pneg %p102
        %p257 = pneg %p126
        %p258 = pneg %p123
        %p259 = pneg %p147
        %p260 = pneg %p144
        %p261 = pneg %p168
        %p262 = pneg %p165
        %p263 = pneg %p194
        %p264 = pneg %p191
        %s265 = sand.u32 %s181, 1
        %s266 = scalar_lea.sflag [#allocation3], %s265
        %s267 = sand.u32 %s181, 1
        %s268 = smul.addr %s267, 8
        %s269 = scalar_lea.vmem [#allocation2], %s268
        %p270 = scmp.lt.s32.totalorder %s21, 1
        %s271 = scalar_select %p270, %s21, 1
        %s272 = smul.addr %s271, 8
        %s273 = scalar_lea.vmem %s0, %s272
        %v275 = vld [vmem:[%s273] sm:$0xff]
        %v276 = vpack.c.bf16 %v275, %v275
        %v277 = vld [vmem:[%s1] sm:$0xf]
        %v278 = vld [vmem:[%s1 + $0x4] sm:$0xf]
        %v279 = vld [vmem:[%s1 + $0x8] sm:$0xf]
        %v280 = vld [vmem:[%s1 + $0xc] sm:$0xf]
        %v281 = vld [vmem:[%s2] sm:$0x1]
        %v283 = vlaneseq
        %v284 = vshrl.u32 %v283, 7
        %v285 = vsub.s32 0, %v284
        %v286 = vrot.slane %v281, %v285
        %v292 = vunpack.c.l.b16 %v277
        %v293 = vunpack.c.l.b16 %v278
        %v294 = vunpack.c.l.b16 %v279
        %v295 = vunpack.c.l.b16 %v280
        %v296 = vpack.c.b16 %v293, %v292
        %v297 = vpack.c.b16 %v295, %v294
        %vm300 = vcmask 261120
        %v302 = vsel %vm300, %v276, 0
        %304 = vmatprep.subr.bf16.mxu0 0
        %305 = vmatpush1.bf16.msra.mxu0 %v296
        %306 = vmatprep.subr.bf16.mxu0 0
        %307 = vmatpush1.bf16.msra.mxu0 %v297
        %308 = vmatprep.subr.bf16.mxu0 0
        %309 = vmatpush1.bf16.msra.mxu0 0
        %310 = vmatprep.subr.bf16.mxu0 0
        %311 = vmatpush1.bf16.msra.mxu0 0
        %312 = vmatprep.subr.bf16.mxu0 0
        %313 = vmatpush1.bf16.msra.mxu0 0
        %314 = vmatprep.subr.bf16.mxu0 0
        %315 = vmatpush1.bf16.msra.mxu0 0
        %316 = vmatprep.subr.bf16.mxu0 0
        %317 = vmatpush1.bf16.msra.mxu0 0
        %318 = vmatprep.subr.bf16.mxu0 0
        %319 = vmatpush1.bf16.msra.mxu0 0
        %320 = vmatprep.subr.bf16.mxu0 0
        %321 = vmatpush1.bf16.msra.mxu0 0
        %322 = vmatprep.subr.bf16.mxu0 0
        %323 = vmatpush1.bf16.msra.mxu0 0
        %324 = vmatprep.subr.bf16.mxu0 0
        %325 = vmatpush1.bf16.msra.mxu0 0
        %326 = vmatprep.subr.bf16.mxu0 0
        %327 = vmatpush1.bf16.msra.mxu0 0
        %328 = vmatprep.subr.bf16.mxu0 0
        %329 = vmatpush1.bf16.msra.mxu0 0
        %330 = vmatprep.subr.bf16.mxu0 0
        %331 = vmatpush1.bf16.msra.mxu0 0
        %332 = vmatprep.subr.bf16.mxu0 0
        %333 = vmatpush1.bf16.msra.mxu0 0
        %334 = vmatprep.subr.bf16.mxu0 0
        %335 = vmatpush1.bf16.msra.mxu0 0
        %336 = vmatprep.mubr.bf16.mxu0 0
        %337 = vmatmul.mubr.bf16.gmra.mrb[0].mxu0 %v302
        %v338 = vpop.f32.mrb[0].mxu0
        %v339 = vadd.f32 %v286, %v338
        %v340 = vpop.f32.mrb[0].mxu0
        %v341 = vpop.f32.mrb[0].mxu0
        %v342 = vpop.f32.mrb[0].mxu0
        %343 = vdwg.mxu0
        %v344 = vmax.f32 %v339, 0.0
        %v345 = vpack.c.bf16 %v344, %v344
        %v346 = vld [vmem:[%s3] sm:$0xf]
        %v347 = vld [vmem:[%s3 + $0x4] sm:$0xf]
        %v348 = vld [vmem:[%s3 + $0x8] sm:$0xf]
        %v349 = vld [vmem:[%s3 + $0xc] sm:$0xf]
        %v350 = vld [vmem:[%s3 + $0x10] sm:$0xf]
        %v351 = vld [vmem:[%s3 + $0x14] sm:$0xf]
        %v352 = vld [vmem:[%s3 + $0x18] sm:$0xf]
        %v353 = vld [vmem:[%s3 + $0x1c] sm:$0xf]
        %v354 = vld [vmem:[%s3 + $0x20] sm:$0xf]
        %v355 = vld [vmem:[%s3 + $0x24] sm:$0xf]
        %v356 = vld [vmem:[%s3 + $0x28] sm:$0xf]
        %v357 = vld [vmem:[%s3 + $0x2c] sm:$0xf]
        %v358 = vld [vmem:[%s3 + $0x30] sm:$0xf]
        %v359 = vld [vmem:[%s3 + $0x34] sm:$0xf]
        %v360 = vld [vmem:[%s3 + $0x38] sm:$0xf]
        %v361 = vld [vmem:[%s3 + $0x3c] sm:$0xf]
        %v362 = vld [vmem:[%s4] sm:$0x1]
        %v364 = vlaneseq
        %v365 = vshrl.u32 %v364, 7
        %v366 = vsub.s32 0, %v365
        %v367 = vrot.slane %v362, %v366
        %v385 = vunpack.c.l.b16 %v346
        %v386 = vunpack.c.l.b16 %v347
        %v387 = vunpack.c.l.b16 %v348
        %v388 = vunpack.c.l.b16 %v349
        %v389 = vunpack.c.l.b16 %v350
        %v390 = vunpack.c.l.b16 %v351
        %v391 = vunpack.c.l.b16 %v352
        %v392 = vunpack.c.l.b16 %v353
        %v393 = vunpack.c.l.b16 %v354
        %v394 = vunpack.c.l.b16 %v355
        %v395 = vunpack.c.l.b16 %v356
        %v396 = vunpack.c.l.b16 %v357
        %v397 = vunpack.c.l.b16 %v358
        %v398 = vunpack.c.l.b16 %v359
        %v399 = vunpack.c.l.b16 %v360
        %v400 = vunpack.c.l.b16 %v361
        %v401 = vpack.c.b16 %v386, %v385
        %v402 = vpack.c.b16 %v388, %v387
        %v403 = vpack.c.b16 %v390, %v389
        %v404 = vpack.c.b16 %v392, %v391
        %v405 = vpack.c.b16 %v394, %v393
        %v406 = vpack.c.b16 %v396, %v395
        %v407 = vpack.c.b16 %v398, %v397
        %v408 = vpack.c.b16 %v400, %v399
        %417 = vmatprep.subr.bf16.mxu0 0
        %418 = vmatpush1.bf16.msra.mxu0 %v401
        %419 = vmatprep.subr.bf16.mxu0 0
        %420 = vmatpush1.bf16.msra.mxu0 %v402
        %421 = vmatprep.subr.bf16.mxu0 0
        %422 = vmatpush1.bf16.msra.mxu0 %v403
        %423 = vmatprep.subr.bf16.mxu0 0
        %424 = vmatpush1.bf16.msra.mxu0 %v404
        %425 = vmatprep.subr.bf16.mxu0 0
        %426 = vmatpush1.bf16.msra.mxu0 %v405
        %427 = vmatprep.subr.bf16.mxu0 0
        %428 = vmatpush1.bf16.msra.mxu0 %v406
        %429 = vmatprep.subr.bf16.mxu0 0
        %430 = vmatpush1.bf16.msra.mxu0 %v407
        %431 = vmatprep.subr.bf16.mxu0 0
        %432 = vmatpush1.bf16.msra.mxu0 %v408
        %433 = vmatprep.subr.bf16.mxu0 0
        %434 = vmatpush1.bf16.msra.mxu0 0
        %435 = vmatprep.subr.bf16.mxu0 0
        %436 = vmatpush1.bf16.msra.mxu0 0
        %437 = vmatprep.subr.bf16.mxu0 0
        %438 = vmatpush1.bf16.msra.mxu0 0
        %439 = vmatprep.subr.bf16.mxu0 0
        %440 = vmatpush1.bf16.msra.mxu0 0
        %441 = vmatprep.subr.bf16.mxu0 0
        %442 = vmatpush1.bf16.msra.mxu0 0
        %443 = vmatprep.subr.bf16.mxu0 0
        %444 = vmatpush1.bf16.msra.mxu0 0
        %445 = vmatprep.subr.bf16.mxu0 0
        %446 = vmatpush1.bf16.msra.mxu0 0
        %447 = vmatprep.subr.bf16.mxu0 0
        %448 = vmatpush1.bf16.msra.mxu0 0
        %449 = vmatprep.mubr.bf16.mxu0 0
        %450 = vmatmul.mubr.bf16.gmra.mrb[0].mxu0 %v345
        %v451 = vpop.f32.mrb[0].mxu0
        %v452 = vadd.f32 %v367, %v451
        %v453 = vpop.f32.mrb[0].mxu0
        %v454 = vpop.f32.mrb[0].mxu0
        %v455 = vpop.f32.mrb[0].mxu0
        %456 = vdwg.mxu0
        %v457 = vmax.f32 %v452, 0.0
        %v458 = vpack.c.bf16 %v457, %v457
        %v459 = vld [vmem:[%s5] sm:$0xf]
        %v460 = vld [vmem:[%s5 + $0x4] sm:$0xf]
        %v461 = vld [vmem:[%s5 + $0x8] sm:$0xf]
        %v462 = vld [vmem:[%s5 + $0xc] sm:$0xf]
        %v463 = vld [vmem:[%s5 + $0x10] sm:$0xf]
        %v464 = vld [vmem:[%s5 + $0x14] sm:$0xf]
        %v465 = vld [vmem:[%s5 + $0x18] sm:$0xf]
        %v466 = vld [vmem:[%s5 + $0x1c] sm:$0xf]
        %v467 = vld [vmem:[%s6] sm:$0x1]
        %v469 = vlaneseq
        %v470 = vshrl.u32 %v469, 7
        %v471 = vsub.s32 0, %v470
        %v472 = vrot.slane %v467, %v471
        %v482 = vunpack.c.l.b16 %v459
        %v483 = vunpack.c.l.b16 %v460
        %v484 = vunpack.c.l.b16 %v461
        %v485 = vunpack.c.l.b16 %v462
        %v486 = vunpack.c.l.b16 %v463
        %v487 = vunpack.c.l.b16 %v464
        %v488 = vunpack.c.l.b16 %v465
        %v489 = vunpack.c.l.b16 %v466
        %v490 = vpack.c.b16 %v483, %v482
        %v491 = vpack.c.b16 %v485, %v484
        %v492 = vpack.c.b16 %v487, %v486
        %v493 = vpack.c.b16 %v489, %v488
        %vm498 = vcmask 523264
        %v500 = vsel %vm498, %v458, 0
        %502 = vmatprep.subr.bf16.mxu0 0
        %503 = vmatpush1.bf16.msra.mxu0 %v490
        %504 = vmatprep.subr.bf16.mxu0 0
        %505 = vmatpush1.bf16.msra.mxu0 %v491
        %506 = vmatprep.subr.bf16.mxu0 0
        %507 = vmatpush1.bf16.msra.mxu0 %v492
        %508 = vmatprep.subr.bf16.mxu0 0
        %509 = vmatpush1.bf16.msra.mxu0 %v493
        %510 = vmatprep.subr.bf16.mxu0 0
        %511 = vmatpush1.bf16.msra.mxu0 0
        %512 = vmatprep.subr.bf16.mxu0 0
        %513 = vmatpush1.bf16.msra.mxu0 0
        %514 = vmatprep.subr.bf16.mxu0 0
        %515 = vmatpush1.bf16.msra.mxu0 0
        %516 = vmatprep.subr.bf16.mxu0 0
        %517 = vmatpush1.bf16.msra.mxu0 0
        %518 = vmatprep.subr.bf16.mxu0 0
        %519 = vmatpush1.bf16.msra.mxu0 0
        %520 = vmatprep.subr.bf16.mxu0 0
        %521 = vmatpush1.bf16.msra.mxu0 0
        %522 = vmatprep.subr.bf16.mxu0 0
        %523 = vmatpush1.bf16.msra.mxu0 0
        %524 = vmatprep.subr.bf16.mxu0 0
        %525 = vmatpush1.bf16.msra.mxu0 0
        %526 = vmatprep.subr.bf16.mxu0 0
        %527 = vmatpush1.bf16.msra.mxu0 0
        %528 = vmatprep.subr.bf16.mxu0 0
        %529 = vmatpush1.bf16.msra.mxu0 0
        %530 = vmatprep.subr.bf16.mxu0 0
        %531 = vmatpush1.bf16.msra.mxu0 0
        %532 = vmatprep.subr.bf16.mxu0 0
        %533 = vmatpush1.bf16.msra.mxu0 0
        %534 = vmatprep.mubr.bf16.mxu0 0
        %535 = vmatmul.mubr.bf16.gmra.mrb[0].mxu0 %v500
        %v536 = vpop.f32.mrb[0].mxu0
        %v537 = vadd.f32 %v472, %v536
        %v538 = vpop.f32.mrb[0].mxu0
        %v539 = vpop.f32.mrb[0].mxu0
        %v540 = vpop.f32.mrb[0].mxu0
        %541 = vdwg.mxu0
        %vm542 = vcmask 130048
        %v543 = vsel %vm542, %v537, -inf
        %544 = vmax.xlane.f32.xlu0 %v543
        %v545 = vpop.xlane.xlu0 %544
        %v546 = vsub.f32 %v537, %v545
        %v547 = vmul.f32 %v546, 1.442695
        %v548 = vpow.pop %v547
        %v549 = vsel %vm542, %v548, 0.0
        %550 = vadd.xlane.f32.xlu0 %v549
        %v551 = vpop.xlane.xlu0 %550
        %v552 = vlog2.pop %v551
        %v553 = vmul.f32 %v552, 0.6931472
        %v554 = vsub.f32 %v546, %v553
        %555 = vst.msk [vmem:[%s269] sm:$0xff] %vm542, %v554
        %s556 = sand.u32 %s181, 1
        %s557 = scalar_lea.sflag [#allocation3], %s556
        %s558 = sand.u32 %s181, 1
        %s559 = smul.addr %s558, 8
        %s560 = scalar_lea.vmem [#allocation2], %s559
        // Predicated region
        $region49: #{tpu_custom_call.1} parent=47 // pred_check
          %p561 = pneg %p191
        $region50: #{tpu_custom_call.1} parent=47 // pred_check_branch
          %563 = sbr.rel (%p561) target = $region52
        $region51: #{tpu_custom_call.1} parent=47 // pred_region
          %s565 = ssub.s32 128, 128
          %566 = vsyncadd %s557, %s565
          %s567 = smul.addr %s21, 128
          %s568 = scalar_lea.hbm %s7, %s567
          %s570 = sshll.u32 %s560, 4
          %s571 = int_to_ptr.vmem [resolvable:$true] %s570
          %573 = dma.vmem_to_hbm [thread:$0]  %s571, 128, %s568, %s557
        $region52: #{tpu_custom_call.1} parent=47 // pred_fallthru
          _
      $region48: #{tpu_custom_call.1} parent=5 // pred_fallthru
        _
      %p574 = scmp.le.s32.totalorder 2, %s16
      // Predicated region
      $region53: #{tpu_custom_call.1} parent=5 // pred_check
        %p575 = pneg %p574
      $region54: #{tpu_custom_call.1} parent=5 // pred_check_branch
        %577 = sbr.rel (%p575) target = $region56
      $region55: #{tpu_custom_call.1} parent=5 // pred_region
        %s578 = ssub.s32 %s16, 2
        // Predicated region
        $region57: #{tpu_custom_call.1} parent=55 // pred_check
          %p579 = pneg %p197
        $region58: #{tpu_custom_call.1} parent=55 // pred_check_branch
          %581 = sbr.rel (%p579) target = $region60
        $region59: #{tpu_custom_call.1} parent=55 // pred_region
          %s582 = sand.u32 %s182, 1
          %s583 = scalar_lea.sflag [#allocation3], %s582
          %s584 = sand.u32 %s182, 1
          %s585 = smul.addr %s584, 8
          %s586 = scalar_lea.vmem [#allocation2], %s585
          %587 = dma.done %s583, 128
        $region60: #{tpu_custom_call.1} parent=55 // pred_fallthru
          _
      $region56: #{tpu_custom_call.1} parent=5 // pred_fallthru
        _
    $region6: #{tpu_custom_call.1} parent=1 // loop_footer
      %s20 = sadd.s32 1, %s16
    $region7: #{tpu_custom_call.1} parent=1 // loop_footer_branch
      %15 = sbr.rel target = $region3
    $region8: #{tpu_custom_call.1} parent=1 // loop_exit
      _
    %588 = vsyncpa [#allocation3], 1
    %s589 = scalar_lea.sflag [#allocation3], 1
    %590 = vsyncpa %s589, 1

</llo_original>
